<compile_context>
chip_gen: v7x
topology: tpu7x:2x2x1
jax: 0.10.0
libtpu: 0.0.40
codegen_flags: <defaults>
</compile_context>

<pallas_src>
import functools
import math

import jax
import jax.numpy as jnp
from jax.experimental import pallas as pl
from jax.experimental.pallas import tpu as pltpu


_LANE = 128
# Size cap (in + out bytes) for the untiled whole-array fallback kernel used
# only for shape-preserving funcs with unknown axis semantics.
_MONOLITHIC_VMEM_BYTES = 16 * 1024 * 1024
_MIN_GRID_BLOCKS = 4  # feed both v7x TensorCores (free on single-TC v5e/v6e)


def _physical_vmem_bytes() -> int:
    try:
        return int(pltpu.get_tpu_info().vmem_capacity_bytes)
    except Exception:
        return 128 * 1024 * 1024  # v5e / v6e default


def _per_buffer_bytes() -> int:
    # v7x has only 64 MiB of VMEM per TensorCore -> cap the pipelined
    # footprint lower there; v5e/v6e (128 MiB physical) get 4 MiB buffers.
    if _physical_vmem_bytes() <= 64 * 1024 * 1024:
        return 3 * 1024 * 1024
    return 4 * 1024 * 1024


def _vmem_limit_bytes(tile_r, tile_c, in_itemsize, out_itemsize) -> int:
    # Double-buffered input + double-buffered output, plus compiler headroom.
    pipelined = 2 * tile_r * tile_c * (in_itemsize + out_itemsize)
    limit = pipelined + 8 * 1024 * 1024
    return int(min(limit, int(_physical_vmem_bytes() * 0.75)))


def _sublane(dtype) -> int:
    # Sublane packing: f32 -> 8, bf16 -> 16, int8/fp8 -> 32.
    return max(8, 32 // jnp.dtype(dtype).itemsize)


def _lane_dense_layout(n_padded):
    """Pick a 2D (rows, cols) view.  cols == tile width, so blocks are
    contiguous HBM slabs.  Prefer the largest cols that still gives >= 8 rows
    (sublane-dense); n_padded is always a multiple of 128."""
    candidates = [c for c in (2048, 1024, 512, 256, 128) if n_padded % c == 0]
    for c in candidates:
        if n_padded // c >= 8:
            return n_padded // c, c
    c = candidates[0]
    return n_padded // c, c


def _choose_tile_rows(rows, cols, sub, itemsize_max, per_buffer_bytes):
    """Largest sublane-multiple row tile within the VMEM budget, then split so
    the (parallel) grid has at least _MIN_GRID_BLOCKS blocks when possible."""
    max_tile_elems = per_buffer_bytes // itemsize_max
    max_rows = max(sub, (max_tile_elems // max(cols, 1)) // sub * sub)
    tile_r = min(rows, max_rows)
    if rows >= _MIN_GRID_BLOCKS * sub and pl.cdiv(rows, tile_r) < _MIN_GRID_BLOCKS:
        target = -(-rows // _MIN_GRID_BLOCKS)        # ceil(rows / min_blocks)
        target = -(-target // sub) * sub             # round up to sublane multiple
        tile_r = max(sub, min(tile_r, target))
    return tile_r


def _apply_func_kernel(func, x_ref, o_ref):
    o_ref[...] = func(x_ref[...]).astype(o_ref.dtype)


def _tiled_elementwise(func, x, out_dtype, out_shape):
    """Tiled, lane-dense, pipelined Pallas path for elementwise funcs."""
    n = x.size
    if n == 0:
        return jnp.zeros(out_shape, out_dtype)

    flat = jnp.reshape(x, (-1,))
    n_padded = -(-n // _LANE) * _LANE
    if n_padded != n:
        # Cheap fusable XLA pad so odd sizes still take the pipelined path.
        flat = jnp.pad(flat, (0, n_padded - n))

    rows, cols = _lane_dense_layout(n_padded)
    x2 = jnp.reshape(flat, (rows, cols))  # metadata-only reshape

    in_item = jnp.dtype(x.dtype).itemsize
    out_item = jnp.dtype(out_dtype).itemsize
    sub = max(_sublane(x.dtype), _sublane(out_dtype))
    tile_r = _choose_tile_rows(rows, cols, sub, max(in_item, out_item),
                               _per_buffer_bytes())
    grid = (pl.cdiv(rows, tile_r),)

    y2 = pl.pallas_call(
        functools.partial(_apply_func_kernel, func),
        out_shape=jax.ShapeDtypeStruct((rows, cols), out_dtype),
        grid=grid,
        in_specs=[pl.BlockSpec((tile_r, cols), lambda i: (i, 0))],
        out_specs=pl.BlockSpec((tile_r, cols), lambda i: (i, 0)),
        compiler_params=pltpu.CompilerParams(
            dimension_semantics=("parallel",),
            vmem_limit_bytes=_vmem_limit_bytes(tile_r, cols, in_item, out_item)),
    )(x2)

    y = jnp.reshape(y2, (-1,))
    if n_padded != n:
        y = y[:n]
    return jnp.reshape(y, out_shape)


def _tiled_axiswise_last(func, x, out_dtype):
    """Tiled path for funcs that reduce/normalize only along the last axis
    (softmax, layernorm, ...).  Leading dims collapse to rows; the reduction
    axis stays whole inside every block, so results are exact while DMA and
    compute still overlap across row tiles."""
    last = x.shape[-1]
    lead = int(math.prod(x.shape[:-1])) if x.ndim > 1 else 1
    x2 = jnp.reshape(x, (lead, last))

    in_item = jnp.dtype(x.dtype).itemsize
    out_item = jnp.dtype(out_dtype).itemsize
    sub = max(_sublane(x.dtype), _sublane(out_dtype))
    tile_r = _choose_tile_rows(lead, last, sub, max(in_item, out_item),
                               _per_buffer_bytes())
    grid = (pl.cdiv(lead, tile_r),)

    # TODO(synk): when last < 128 stores are masked (vst.msk); mapping a large
    # non-reduced axis to lanes instead would need a transpose of the view.
    y2 = pl.pallas_call(
        functools.partial(_apply_func_kernel, func),
        out_shape=jax.ShapeDtypeStruct((lead, last), out_dtype),
        grid=grid,
        in_specs=[pl.BlockSpec((tile_r, last), lambda i: (i, 0))],
        out_specs=pl.BlockSpec((tile_r, last), lambda i: (i, 0)),
        compiler_params=pltpu.CompilerParams(
            dimension_semantics=("parallel",),
            vmem_limit_bytes=_vmem_limit_bytes(tile_r, last, in_item, out_item)),
    )(x2)
    return jnp.reshape(y2, x.shape)


class PallasLambda:
    """JAX/Pallas equivalent of the PyTorch `Lambda` module.

    Hints:
      * `elementwise=True`   -> func is a purely elementwise map; runs on the
        tiled lane-dense pipelined path.  (Contract: func must be
        shape-agnostic -- no axis-dependent ops or per-axis broadcasts.)
      * `axiswise_last=True` -> func reduces/normalizes only along the last
        axis and is independent across all other elements; runs on the tiled
        leading-rows path with the last axis kept whole per block.
    """

    def __init__(self, func, elementwise=False, axiswise_last=False):
        self.func = func
        self.elementwise = elementwise
        self.axiswise_last = axiswise_last

    def __call__(self, x):
        out_aval = jax.eval_shape(self.func, x)
        out_shape = tuple(out_aval.shape)
        out_dtype = out_aval.dtype

        if out_shape != tuple(x.shape):
            # View / flatten / reduction style func.  The canonical usage
            # `lambda x: x.view(x.size(0), -1)` is a metadata-only reshape in
            # XLA; a Pallas copy kernel would only add a full extra HBM
            # read+write for zero compute.
            # TODO(synk): intentionally no Pallas kernel for zero-compute ops.
            return self.func(x)

        if self.elementwise:
            return _tiled_elementwise(self.func, x, out_dtype, out_shape)

        if self.axiswise_last and x.ndim >= 1:
            return _tiled_axiswise_last(self.func, x, out_dtype)

        # Shape-preserving func with unknown axis semantics: run the func on
        # the whole array inside one VMEM-resident block so its semantics on
        # the original N-D shape are preserved exactly.
        total_bytes = x.size * jnp.dtype(x.dtype).itemsize \
            + x.size * jnp.dtype(out_dtype).itemsize
        if total_bytes > _MONOLITHIC_VMEM_BYTES:
            # TODO(synk): too large for one VMEM block; a tiled version would
            # need knowledge of the func's reduction axes to stay correct.
            return self.func(x)

        in_ndim = x.ndim
        out_ndim = len(out_shape)
        return pl.pallas_call(
            functools.partial(_apply_func_kernel, self.func),
            out_shape=jax.ShapeDtypeStruct(out_shape, out_dtype),
            grid=(1,),
            in_specs=[pl.BlockSpec(tuple(x.shape), lambda i: (0,) * in_ndim)],
            out_specs=pl.BlockSpec(out_shape, lambda i: (0,) * out_ndim),
            compiler_params=pltpu.CompilerParams(
                vmem_limit_bytes=int(min(4 * total_bytes + 8 * 1024 * 1024,
                                         _physical_vmem_bytes() * 0.75))),
        )(x)


if __name__ == "__main__":
    key = jax.random.PRNGKey(0)
    # Small NCHW input: batch=2, channels=4, spatial=16x16.
    x = jax.random.normal(key, (2, 4, 16, 16), dtype=jnp.float32)
    # Odd-sized tensor (not a multiple of 128 elements) exercises the pad path.
    x_odd = jax.random.normal(jax.random.PRNGKey(1), (3, 5, 7), dtype=jnp.float32)

    # Canonical PyTorch usage: Lambda(lambda x: x.view(x.size(0), -1)).
    flatten_lambda = PallasLambda(lambda t: t.reshape(t.shape[0], -1))
    # Elementwise usages: compute happens inside the tiled Pallas kernel.
    affine_lambda = PallasLambda(lambda t: t * 2.0 + 1.0, elementwise=True)
    gelu_lambda = PallasLambda(jax.nn.gelu, elementwise=True)
    relu_lambda = PallasLambda(jax.nn.relu, elementwise=True)
    # Last-axis softmax: tiled over collapsed leading dims.
    softmax_tiled_lambda = PallasLambda(
        lambda t: jax.nn.softmax(t, axis=-1), axiswise_last=True)
    # Same func with no hint: exercises the monolithic fallback block.
    softmax_mono_lambda = PallasLambda(lambda t: jax.nn.softmax(t, axis=-1))

    y_flat = jax.block_until_ready(flatten_lambda(x))
    y_aff = jax.block_until_ready(affine_lambda(x))
    y_gelu = jax.block_until_ready(gelu_lambda(x))
    y_relu = jax.block_until_ready(relu_lambda(x_odd))
    y_sm_t = jax.block_until_ready(softmax_tiled_lambda(x))
    y_sm_m = jax.block_until_ready(softmax_mono_lambda(x))

    # Reference semantics (plain JAX / what torch would produce).
    ref_flat = jnp.reshape(x, (x.shape[0], -1))
    ref_aff = x * 2.0 + 1.0
    ref_gelu = jax.nn.gelu(x)
    ref_relu = jax.nn.relu(x_odd)
    ref_sm = jax.nn.softmax(x, axis=-1)

    assert y_flat.shape == (2, 4 * 16 * 16) and y_flat.dtype == jnp.float32
    assert y_aff.shape == x.shape and y_aff.dtype == jnp.float32
    assert y_gelu.shape == x.shape and y_relu.shape == x_odd.shape
    assert y_sm_t.shape == x.shape and y_sm_m.shape == x.shape
    assert bool(jnp.allclose(y_flat, ref_flat, atol=1e-6, rtol=1e-6))
    assert bool(jnp.allclose(y_aff, ref_aff, atol=1e-6, rtol=1e-6))
    assert bool(jnp.allclose(y_gelu, ref_gelu, atol=1e-5, rtol=1e-5))
    assert bool(jnp.allclose(y_relu, ref_relu, atol=1e-6, rtol=1e-6))
    assert bool(jnp.allclose(y_sm_t, ref_sm, atol=1e-5, rtol=1e-5))
    assert bool(jnp.allclose(y_sm_m, ref_sm, atol=1e-5, rtol=1e-5))

    print("KERNEL_OK")
</pallas_src>

<mosaic_0001>
module attributes {stable_mosaic.version = 11 : i64} {
  func.func @_apply_func_kernel(%arg0: i32, %arg1: memref<8x256xf32, #tpu.memory_space<vmem>>, %arg2: memref<8x256xf32, #tpu.memory_space<vmem>>) attributes {dimension_semantics = [#tpu.dimension_semantics<parallel>], iteration_bounds = array<i64: 1>, scalar_prefetch = 0 : i64, scratch_operands = 0 : i64, tpu.core_type = #tpu.core_type<tc>, window_params = [{transform_indices = @transform_0, window_bounds = array<i64: 8, 256>}, {transform_indices = @transform_1, window_bounds = array<i64: 8, 256>}]} {
    %c0 = arith.constant 0 : index
    %c0_0 = arith.constant 0 : index
    %0 = vector.load %arg1[%c0, %c0_0] : memref<8x256xf32, #tpu.memory_space<vmem>>, vector<8x256xf32>
    %cst = arith.constant 2.000000e+00 : f32
    %1 = vector.broadcast %cst : f32 to vector<8x256xf32>
    %2 = arith.mulf %0, %1 : vector<8x256xf32>
    %cst_1 = arith.constant 1.000000e+00 : f32
    %3 = vector.broadcast %cst_1 : f32 to vector<8x256xf32>
    %4 = arith.addf %2, %3 : vector<8x256xf32>
    %c0_2 = arith.constant 0 : index
    %c0_3 = arith.constant 0 : index
    %5 = vector.load %arg2[%c0_2, %c0_3] : memref<8x256xf32, #tpu.memory_space<vmem>>, vector<8x256xf32>
    tpu.vector_store %arg2[%c0_2, %c0_3], %4 {strides = array<i32>} : memref<8x256xf32, #tpu.memory_space<vmem>>, vector<8x256xf32>,
    return
  }
  func.func @transform_0(%arg0: i32) -> (i32, i32) {
    %c0_i32 = arith.constant 0 : i32
    %c0_i32_0 = arith.constant 0 : i32
    return %arg0, %c0_i32 : i32, i32
  }
  func.func @transform_1(%arg0: i32) -> (i32, i32) {
    %c0_i32 = arith.constant 0 : i32
    %c0_i32_0 = arith.constant 0 : i32
    return %arg0, %c0_i32 : i32, i32
  }
}

</mosaic_0001>

<llo_original>
// kernel: tpu_custom_call.1
$region0: #{tpu_custom_call.1}
  #allocation0 [shape = 'u32[]', space=smem, size = 0x4, offset = 0x4, fixed_abs, tag = 'smem constant byte address 0x4 - core index']
  #allocation1 [shape = 'u32[144,128]{1,0:T(1,128)}', space=vmem, size = 0x12000, scoped, tag = 'internal scratch']
  %s0 = inlined_call_operand.hbm [shape: f32[8,256], index: 0, kind: input, shape index: {}]
  %s1 = inlined_call_operand.hbm [shape: f32[8,256], index: 1, kind: output, shape index: {}]
  %s2 = sld [smem:[#allocation0]]
  $region18: #{tpu_custom_call.1} parent=0
    _
  %s4 = ssub.s32 1, %s2
  %s5 = scalar_select 0, %s4, %s2
  $region1: #{tpu_custom_call.1} parent=0
    #allocation2 [shape = 'u8[8192]{0}', space=vmem, size = 0x2000, scoped, tag = 'input window, operand 0, single buffered']
    #allocation3 [shape = 's32[1]{0}', space=sflag, size = 0x4, scoped, tag = 'scoped memory for tpu_custom_call.1']
    #allocation4 [shape = 's32[1]{0}', space=sflag, size = 0x4, scoped, tag = 'scoped memory for tpu_custom_call.1']
    #allocation5 [shape = 'u8[8192]{0}', space=vmem, size = 0x2000, scoped, tag = 'output window, operand 0, single buffered']
    %6 = vsyncpa [#allocation3], 0
    %7 = vsyncpa [#allocation4], 0
    // Predicated region
    $region2: #{tpu_custom_call.1} parent=1 // pred_check
      _
    $region3: #{tpu_custom_call.1} parent=1 // pred_check_branch
      %9 = sbr.rel (0) target = $region5
    $region4: #{tpu_custom_call.1} parent=1 // pred_region
      %s11 = ssub.s32 256, 256
      %12 = vsyncadd [#allocation3], %s11
      %s14 = sshll.u32 [#allocation2], 4
      %s15 = int_to_ptr.vmem [resolvable:$true] %s14
      %17 = dma.hbm_to_vmem [thread:$0]  %s0, 256, %s15, [#allocation3]
    $region5: #{tpu_custom_call.1} parent=1 // pred_fallthru
      _
    // Predicated region
    $region6: #{tpu_custom_call.1} parent=1 // pred_check
      _
    $region7: #{tpu_custom_call.1} parent=1 // pred_check_branch
      %19 = sbr.rel (0) target = $region9
    $region8: #{tpu_custom_call.1} parent=1 // pred_region
      %20 = dma.done [#allocation3], 256
    $region9: #{tpu_custom_call.1} parent=1 // pred_fallthru
      _
    %v21 = vld [vmem:[#allocation2] sm:$0xff]
    %v22 = vld [vmem:[#allocation2 + $0x8] sm:$0xff]
    %v23 = vmul.f32 %v21, 2.0
    %v24 = vmul.f32 %v22, 2.0
    %v25 = vadd.f32 %v23, 1.0
    %v26 = vadd.f32 %v24, 1.0
    %27 = vst [vmem:[#allocation5] sm:$0xff] %v25
    %28 = vst [vmem:[#allocation5 + $0x8] sm:$0xff] %v26
    // Predicated region
    $region10: #{tpu_custom_call.1} parent=1 // pred_check
      _
    $region11: #{tpu_custom_call.1} parent=1 // pred_check_branch
      %30 = sbr.rel (0) target = $region13
    $region12: #{tpu_custom_call.1} parent=1 // pred_region
      %s32 = ssub.s32 256, 256
      %33 = vsyncadd [#allocation4], %s32
      %s35 = sshll.u32 [#allocation5], 4
      %s36 = int_to_ptr.vmem [resolvable:$true] %s35
      %38 = dma.vmem_to_hbm [thread:$0]  %s36, 256, %s1, [#allocation4]
    $region13: #{tpu_custom_call.1} parent=1 // pred_fallthru
      _
    // Predicated region
    $region14: #{tpu_custom_call.1} parent=1 // pred_check
      _
    $region15: #{tpu_custom_call.1} parent=1 // pred_check_branch
      %40 = sbr.rel (0) target = $region17
    $region16: #{tpu_custom_call.1} parent=1 // pred_region
      %41 = dma.done [#allocation4], 256
    $region17: #{tpu_custom_call.1} parent=1 // pred_fallthru
      _
    %42 = vsyncpa [#allocation3], 1
    %43 = vsyncpa [#allocation4], 1

</llo_original>
